<compile_context>
chip_gen: v7x
topology: tpu7x:2x2x1
jax: 0.10.0
libtpu: 0.0.40
codegen_flags: <defaults>
</compile_context>

<pallas_src>
import jax
import jax.numpy as jnp
from jax.experimental import pallas as pl
from jax.experimental.pallas import tpu as pltpu

_OUT_DIM = 784
_OUT_PAD = 896          # 7 * 128 -> lane-dense output width
_MAX_TILE = 512         # rows per batch tile; safe under default scoped VMEM on v5e/v6e/v7x


def _mlp_kernel(x_ref,
                w1_ref, b1_ref,
                w2_ref, b2_ref,
                w3_ref, b3_ref,
                w4_ref, b4_ref,
                o_ref):
    x = x_ref[...]                                               # (TB, 2) f32
    # Layer 1: K=2 -> VPU outer-product.
    h = (x[:, 0:1] * w1_ref[0:1, :]
         + x[:, 1:2] * w1_ref[1:2, :]
         + b1_ref[...])
    h = jnp.maximum(h, 0.0)
    # Layers 2-4 on the MXU with f32 accumulation.
    w_dt = w2_ref.dtype
    h = jnp.dot(h.astype(w_dt), w2_ref[...],
                preferred_element_type=jnp.float32) + b2_ref[...]
    h = jnp.maximum(h, 0.0)
    h = jnp.dot(h.astype(w_dt), w3_ref[...],
                preferred_element_type=jnp.float32) + b3_ref[...]
    h = jnp.maximum(h, 0.0)
    h = jnp.dot(h.astype(w_dt), w4_ref[...],
                preferred_element_type=jnp.float32) + b4_ref[...]
    o_ref[...] = h.astype(o_ref.dtype)


def utility_conditioner_forward(x, params, *, bf16_weights=False):
    """x: (B, 2) float32.  params: dict of W_i (in, out) and b_i (1, out), float32.

    Weights are stored as (in, out), i.e. already transposed vs. nn.Linear.weight.
    Returns (B, 784) float32 identical (to f32 rounding) to the PyTorch module.
    """
    B = x.shape[0]

    w1, b1 = params["w1"], params["b1"]
    w2, b2 = params["w2"], params["b2"]
    w3, b3 = params["w3"], params["b3"]
    w4, b4 = params["w4"], params["b4"]

    # Lane-dense output: pad the last layer with zero columns (sliced off at the end).
    w4p = jnp.pad(w4, ((0, 0), (0, _OUT_PAD - _OUT_DIM)))
    b4p = jnp.pad(b4, ((0, 0), (0, _OUT_PAD - _OUT_DIM)))

    if bf16_weights:
        # Optional: halves resident weight VMEM / weight DMA at a small accuracy cost.
        w2 = w2.astype(jnp.bfloat16)
        w3 = w3.astype(jnp.bfloat16)
        w4p = w4p.astype(jnp.bfloat16)

    # Batch tile: multiple of 8 sublanes, capped so VMEM stays bounded on every generation.
    tb = min(_MAX_TILE, max(8, ((B + 7) // 8) * 8))
    num_tiles = pl.cdiv(B, tb)
    b_pad = num_tiles * tb
    xp = jnp.pad(x, ((0, b_pad - B), (0, 0))) if b_pad != B else x

    # Whole-array, grid-invariant block: stays resident in VMEM across all batch tiles.
    def resident(a):
        nd = a.ndim
        return pl.BlockSpec(a.shape, lambda i, _nd=nd: (0,) * _nd)

    wbytes = sum(int(a.size) * a.dtype.itemsize for a in (w1, w2, w3, w4p))
    bbytes = sum(int(a.size) * a.dtype.itemsize for a in (b1, b2, b3, b4p))
    flops = 2 * B * (2 * 16 + 16 * 64 + 64 * 256 + 256 * _OUT_DIM)
    bytes_accessed = xp.size * 4 + b_pad * _OUT_PAD * 4 + wbytes + bbytes

    out = pl.pallas_call(
        _mlp_kernel,
        out_shape=jax.ShapeDtypeStruct((b_pad, _OUT_PAD), jnp.float32),
        grid=(num_tiles,),
        in_specs=[pl.BlockSpec((tb, 2), lambda i: (i, 0)),
                  resident(w1), resident(b1),
                  resident(w2), resident(b2),
                  resident(w3), resident(b3),
                  resident(w4p), resident(b4p)],
        out_specs=pl.BlockSpec((tb, _OUT_PAD), lambda i: (i, 0)),
        compiler_params=pltpu.CompilerParams(
            dimension_semantics=("parallel",)),
        cost_estimate=pl.CostEstimate(flops=flops,
                                      transcendentals=0,
                                      bytes_accessed=bytes_accessed),
    )(xp, w1, b1, w2, b2, w3, b3, w4p, b4p)

    return out[:B, :_OUT_DIM]


def init_params(key):
    """Deterministic synthetic params matching nn.Linear shapes (stored as (in, out), f32)."""
    dims = [(2, 16), (16, 64), (64, 256), (256, 784)]
    params = {}
    for idx, (fan_in, fan_out) in enumerate(dims, start=1):
        key, kw, kb = jax.random.split(key, 3)
        bound = 1.0 / jnp.sqrt(fan_in)  # PyTorch Linear default U(-1/sqrt(in), 1/sqrt(in))
        params[f"w{idx}"] = jax.random.uniform(
            kw, (fan_in, fan_out), jnp.float32, minval=-bound, maxval=bound)
        params[f"b{idx}"] = jax.random.uniform(
            kb, (1, fan_out), jnp.float32, minval=-bound, maxval=bound)
    return params


def _reference_forward(x, params):
    h = x
    for i in range(1, 5):
        h = h @ params[f"w{i}"] + params[f"b{i}"]
        if i < 4:
            h = jnp.maximum(h, 0.0)
    return h


if __name__ == "__main__":
    key = jax.random.PRNGKey(0)
    kp, kx = jax.random.split(key)
    params = init_params(kp)

    B = 2
    x = jax.random.normal(kx, (B, 2), jnp.float32)

    out = jax.block_until_ready(utility_conditioner_forward(x, params))

    ref = _reference_forward(x, params)
    assert out.shape == (B, _OUT_DIM), out.shape
    # Full f32 path -> tight agreement with the reference.
    assert jnp.allclose(out, ref, atol=1e-4, rtol=1e-4), \
        float(jnp.max(jnp.abs(out - ref)))

    print("KERNEL_OK")
</pallas_src>

<mosaic_0001>
module attributes {stable_mosaic.version = 11 : i64} {
  func.func @_mlp_kernel(%arg0: i32, %arg1: memref<8x2xf32, #tpu.memory_space<vmem>>, %arg2: memref<2x16xf32, #tpu.memory_space<vmem>>, %arg3: memref<1x16xf32, #tpu.memory_space<vmem>>, %arg4: memref<16x64xf32, #tpu.memory_space<vmem>>, %arg5: memref<1x64xf32, #tpu.memory_space<vmem>>, %arg6: memref<64x256xf32, #tpu.memory_space<vmem>>, %arg7: memref<1x256xf32, #tpu.memory_space<vmem>>, %arg8: memref<256x896xf32, #tpu.memory_space<vmem>>, %arg9: memref<1x896xf32, #tpu.memory_space<vmem>>, %arg10: memref<8x896xf32, #tpu.memory_space<vmem>>) attributes {dimension_semantics = [#tpu.dimension_semantics<parallel>], iteration_bounds = array<i64: 1>, scalar_prefetch = 0 : i64, scratch_operands = 0 : i64, tpu.core_type = #tpu.core_type<tc>, window_params = [{transform_indices = @transform_0, window_bounds = array<i64: 8, 2>}, {pipeline_mode = #tpu.pipeline_mode<synchronous>, transform_indices = @transform_1, window_bounds = array<i64: 2, 16>}, {pipeline_mode = #tpu.pipeline_mode<synchronous>, transform_indices = @transform_2, window_bounds = array<i64: 1, 16>}, {pipeline_mode = #tpu.pipeline_mode<synchronous>, transform_indices = @transform_3, window_bounds = array<i64: 16, 64>}, {pipeline_mode = #tpu.pipeline_mode<synchronous>, transform_indices = @transform_4, window_bounds = array<i64: 1, 64>}, {pipeline_mode = #tpu.pipeline_mode<synchronous>, transform_indices = @transform_5, window_bounds = array<i64: 64, 256>}, {pipeline_mode = #tpu.pipeline_mode<synchronous>, transform_indices = @transform_6, window_bounds = array<i64: 1, 256>}, {pipeline_mode = #tpu.pipeline_mode<synchronous>, transform_indices = @transform_7, window_bounds = array<i64: 256, 896>}, {pipeline_mode = #tpu.pipeline_mode<synchronous>, transform_indices = @transform_8, window_bounds = array<i64: 1, 896>}, {transform_indices = @transform_9, window_bounds = array<i64: 8, 896>}]} {
    %c0 = arith.constant 0 : index
    %c0_0 = arith.constant 0 : index
    %0 = vector.load %arg1[%c0, %c0_0] : memref<8x2xf32, #tpu.memory_space<vmem>>, vector<8x2xf32>
    %1 = vector.extract_strided_slice %0 {offsets = [0, 0], sizes = [8, 1], strides = [1, 1]} : vector<8x2xf32> to vector<8x1xf32>
    %c0_1 = arith.constant 0 : index
    %c0_2 = arith.constant 0 : index
    %2 = vector.load %arg2[%c0_1, %c0_2] : memref<2x16xf32, #tpu.memory_space<vmem>>, vector<1x16xf32>
    %3 = vector.broadcast %1 : vector<8x1xf32> to vector<8x16xf32>
    %4 = vector.broadcast %2 : vector<1x16xf32> to vector<8x16xf32>
    %5 = arith.mulf %3, %4 : vector<8x16xf32>
    %6 = vector.extract_strided_slice %0 {offsets = [0, 1], sizes = [8, 1], strides = [1, 1]} : vector<8x2xf32> to vector<8x1xf32>
    %c1 = arith.constant 1 : index
    %c0_3 = arith.constant 0 : index
    %7 = vector.load %arg2[%c1, %c0_3] : memref<2x16xf32, #tpu.memory_space<vmem>>, vector<1x16xf32>
    %8 = vector.broadcast %6 : vector<8x1xf32> to vector<8x16xf32>
    %9 = vector.broadcast %7 : vector<1x16xf32> to vector<8x16xf32>
    %10 = arith.mulf %8, %9 : vector<8x16xf32>
    %11 = arith.addf %5, %10 : vector<8x16xf32>
    %c0_4 = arith.constant 0 : index
    %c0_5 = arith.constant 0 : index
    %12 = vector.load %arg3[%c0_4, %c0_5] : memref<1x16xf32, #tpu.memory_space<vmem>>, vector<1x16xf32>
    %13 = vector.broadcast %12 : vector<1x16xf32> to vector<8x16xf32>
    %14 = arith.addf %11, %13 : vector<8x16xf32>
    %cst = arith.constant 0.000000e+00 : f32
    %15 = vector.broadcast %cst : f32 to vector<8x16xf32>
    %16 = arith.maximumf %14, %15 : vector<8x16xf32>
    %c0_6 = arith.constant 0 : index
    %c0_7 = arith.constant 0 : index
    %17 = vector.load %arg4[%c0_6, %c0_7] : memref<16x64xf32, #tpu.memory_space<vmem>>, vector<16x64xf32>
    %cst_8 = arith.constant dense<0.000000e+00> : vector<8x64xf32>
    %18 = tpu.matmul %16, %17, %cst_8 {dimension_numbers = #tpu.dot_dimension_numbers<[1], [0], [0], [1], [0, 0, 1, 1], [], []>} : vector<8x16xf32>, vector<16x64xf32>, vector<8x64xf32> -> vector<8x64xf32>
    %c0_9 = arith.constant 0 : index
    %c0_10 = arith.constant 0 : index
    %19 = vector.load %arg5[%c0_9, %c0_10] : memref<1x64xf32, #tpu.memory_space<vmem>>, vector<1x64xf32>
    %20 = vector.broadcast %19 : vector<1x64xf32> to vector<8x64xf32>
    %21 = arith.addf %18, %20 : vector<8x64xf32>
    %cst_11 = arith.constant 0.000000e+00 : f32
    %22 = vector.broadcast %cst_11 : f32 to vector<8x64xf32>
    %23 = arith.maximumf %21, %22 : vector<8x64xf32>
    %c0_12 = arith.constant 0 : index
    %c0_13 = arith.constant 0 : index
    %24 = vector.load %arg6[%c0_12, %c0_13] : memref<64x256xf32, #tpu.memory_space<vmem>>, vector<64x256xf32>
    %cst_14 = arith.constant dense<0.000000e+00> : vector<8x256xf32>
    %25 = tpu.matmul %23, %24, %cst_14 {dimension_numbers = #tpu.dot_dimension_numbers<[1], [0], [0], [1], [0, 0, 1, 1], [], []>} : vector<8x64xf32>, vector<64x256xf32>, vector<8x256xf32> -> vector<8x256xf32>
    %c0_15 = arith.constant 0 : index
    %c0_16 = arith.constant 0 : index
    %26 = vector.load %arg7[%c0_15, %c0_16] : memref<1x256xf32, #tpu.memory_space<vmem>>, vector<1x256xf32>
    %27 = vector.broadcast %26 : vector<1x256xf32> to vector<8x256xf32>
    %28 = arith.addf %25, %27 : vector<8x256xf32>
    %cst_17 = arith.constant 0.000000e+00 : f32
    %29 = vector.broadcast %cst_17 : f32 to vector<8x256xf32>
    %30 = arith.maximumf %28, %29 : vector<8x256xf32>
    %c0_18 = arith.constant 0 : index
    %c0_19 = arith.constant 0 : index
    %31 = vector.load %arg8[%c0_18, %c0_19] : memref<256x896xf32, #tpu.memory_space<vmem>>, vector<256x896xf32>
    %cst_20 = arith.constant dense<0.000000e+00> : vector<8x896xf32>
    %32 = tpu.matmul %30, %31, %cst_20 {dimension_numbers = #tpu.dot_dimension_numbers<[1], [0], [0], [1], [0, 0, 1, 1], [], []>} : vector<8x256xf32>, vector<256x896xf32>, vector<8x896xf32> -> vector<8x896xf32>
    %c0_21 = arith.constant 0 : index
    %c0_22 = arith.constant 0 : index
    %33 = vector.load %arg9[%c0_21, %c0_22] : memref<1x896xf32, #tpu.memory_space<vmem>>, vector<1x896xf32>
    %34 = vector.broadcast %33 : vector<1x896xf32> to vector<8x896xf32>
    %35 = arith.addf %32, %34 : vector<8x896xf32>
    %c0_23 = arith.constant 0 : index
    %c0_24 = arith.constant 0 : index
    %36 = vector.load %arg10[%c0_23, %c0_24] : memref<8x896xf32, #tpu.memory_space<vmem>>, vector<8x896xf32>
    tpu.vector_store %arg10[%c0_23, %c0_24], %35 {strides = array<i32>} : memref<8x896xf32, #tpu.memory_space<vmem>>, vector<8x896xf32>,
    return
  }
  func.func @transform_0(%arg0: i32) -> (i32, i32) {
    %c0_i32 = arith.constant 0 : i32
    %c0_i32_0 = arith.constant 0 : i32
    return %arg0, %c0_i32 : i32, i32
  }
  func.func @transform_1(%arg0: i32) -> (i32, i32) {
    %c0_i32 = arith.constant 0 : i32
    %c0_i32_0 = arith.constant 0 : i32
    %c0_i32_1 = arith.constant 0 : i32
    return %c0_i32, %c0_i32_0 : i32, i32
  }
  func.func @transform_2(%arg0: i32) -> (i32, i32) {
    %c0_i32 = arith.constant 0 : i32
    %c0_i32_0 = arith.constant 0 : i32
    %c0_i32_1 = arith.constant 0 : i32
    return %c0_i32, %c0_i32_0 : i32, i32
  }
  func.func @transform_3(%arg0: i32) -> (i32, i32) {
    %c0_i32 = arith.constant 0 : i32
    %c0_i32_0 = arith.constant 0 : i32
    %c0_i32_1 = arith.constant 0 : i32
    return %c0_i32, %c0_i32_0 : i32, i32
  }
  func.func @transform_4(%arg0: i32) -> (i32, i32) {
    %c0_i32 = arith.constant 0 : i32
    %c0_i32_0 = arith.constant 0 : i32
    %c0_i32_1 = arith.constant 0 : i32
    return %c0_i32, %c0_i32_0 : i32, i32
  }
  func.func @transform_5(%arg0: i32) -> (i32, i32) {
    %c0_i32 = arith.constant 0 : i32
    %c0_i32_0 = arith.constant 0 : i32
    %c0_i32_1 = arith.constant 0 : i32
    return %c0_i32, %c0_i32_0 : i32, i32
  }
  func.func @transform_6(%arg0: i32) -> (i32, i32) {
    %c0_i32 = arith.constant 0 : i32
    %c0_i32_0 = arith.constant 0 : i32
    %c0_i32_1 = arith.constant 0 : i32
    return %c0_i32, %c0_i32_0 : i32, i32
  }
  func.func @transform_7(%arg0: i32) -> (i32, i32) {
    %c0_i32 = arith.constant 0 : i32
    %c0_i32_0 = arith.constant 0 : i32
    %c0_i32_1 = arith.constant 0 : i32
    return %c0_i32, %c0_i32_0 : i32, i32
  }
  func.func @transform_8(%arg0: i32) -> (i32, i32) {
    %c0_i32 = arith.constant 0 : i32
    %c0_i32_0 = arith.constant 0 : i32
    %c0_i32_1 = arith.constant 0 : i32
    return %c0_i32, %c0_i32_0 : i32, i32
  }
  func.func @transform_9(%arg0: i32) -> (i32, i32) {
    %c0_i32 = arith.constant 0 : i32
    %c0_i32_0 = arith.constant 0 : i32
    return %arg0, %c0_i32 : i32, i32
  }
}

</mosaic_0001>

<llo_original>
// kernel: tpu_custom_call.1
$region0: #{tpu_custom_call.1}
  #allocation0 [shape = 'u32[]', space=smem, size = 0x4, offset = 0x4, fixed_abs, tag = 'smem constant byte address 0x4 - core index']
  #allocation1 [shape = 'u32[144,128]{1,0:T(1,128)}', space=vmem, size = 0x12000, scoped, tag = 'internal scratch']
  %s0 = inlined_call_operand.vmem [shape: f32[8,2], index: 0, kind: input, shape index: {}]
  %s1 = inlined_call_operand.vmem [shape: f32[2,16], index: 1, kind: input, shape index: {}]
  %s2 = inlined_call_operand.hbm [shape: f32[1,16], index: 2, kind: input, shape index: {}]
  %s3 = inlined_call_operand.vmem [shape: f32[16,64], index: 3, kind: input, shape index: {}]
  %s4 = inlined_call_operand.hbm [shape: f32[1,64], index: 4, kind: input, shape index: {}]
  %s5 = inlined_call_operand.hbm [shape: f32[64,256], index: 5, kind: input, shape index: {}]
  %s6 = inlined_call_operand.vmem [shape: f32[1,256], index: 6, kind: input, shape index: {}]
  %s7 = inlined_call_operand.hbm [shape: f32[256,896], index: 7, kind: input, shape index: {}]
  %s8 = inlined_call_operand.vmem [shape: f32[1,896], index: 8, kind: input, shape index: {}]
  %s9 = inlined_call_operand.hbm [shape: f32[8,896], index: 9, kind: output, shape index: {}]
  %s10 = sld [smem:[#allocation0]]
  $region62: #{tpu_custom_call.1} parent=0
    _
  %s12 = ssub.s32 1, %s10
  %s13 = scalar_select 0, %s12, %s10
  $region1: #{tpu_custom_call.1} parent=0
    #allocation2 [shape = 'u8[512]{0}', space=vmem, size = 0x400, scoped, tag = 'input window, operand 2, single buffered']
    #allocation3 [shape = 's32[1]{0}', space=sflag, size = 0x4, scoped, tag = 'scoped memory for tpu_custom_call.1']
    #allocation4 [shape = 's32[1]{0}', space=sflag, size = 0x4, scoped, tag = 'scoped memory for tpu_custom_call.1']
    #allocation5 [shape = 'u8[512]{0}', space=vmem, size = 0x400, scoped, tag = 'input window, operand 4, single buffered']
    #allocation6 [shape = 's32[1]{0}', space=sflag, size = 0x4, scoped, tag = 'scoped memory for tpu_custom_call.1']
    #allocation7 [shape = 'u8[65536]{0}', space=vmem, size = 0x10000, scoped, tag = 'input window, operand 5, single buffered']
    #allocation8 [shape = 'u8[917504]{0}', space=vmem, size = 0xe0000, scoped, tag = 'input window, operand 7, single buffered']
    #allocation9 [shape = 's32[1]{0}', space=sflag, size = 0x4, scoped, tag = 'scoped memory for tpu_custom_call.1']
    #allocation10 [shape = 'u8[28672]{0}', space=vmem, size = 0x7000, scoped, tag = 'output window, operand 0, single buffered']
    %14 = vsyncpa [#allocation3], 0
    %15 = vsyncpa [#allocation6], 0
    %16 = vsyncpa [#allocation9], 0
    %17 = vsyncpa [#allocation4], 0
    // Predicated region
    $region2: #{tpu_custom_call.1} parent=1 // pred_check
      _
    $region3: #{tpu_custom_call.1} parent=1 // pred_check_branch
      %19 = sbr.rel (0) target = $region5
    $region4: #{tpu_custom_call.1} parent=1 // pred_region
      _
    $region5: #{tpu_custom_call.1} parent=1 // pred_fallthru
      _
    // Predicated region
    $region6: #{tpu_custom_call.1} parent=1 // pred_check
      _
    $region7: #{tpu_custom_call.1} parent=1 // pred_check_branch
      %21 = sbr.rel (0) target = $region9
    $region8: #{tpu_custom_call.1} parent=1 // pred_region
      _
    $region9: #{tpu_custom_call.1} parent=1 // pred_fallthru
      _
    // Predicated region
    $region10: #{tpu_custom_call.1} parent=1 // pred_check
      _
    $region11: #{tpu_custom_call.1} parent=1 // pred_check_branch
      %23 = sbr.rel (0) target = $region13
    $region12: #{tpu_custom_call.1} parent=1 // pred_region
      %s25 = ssub.s32 16, 16
      %26 = vsyncadd [#allocation3], %s25
      %s28 = sshll.u32 [#allocation2], 4
      %s29 = int_to_ptr.vmem [resolvable:$true] %s28
      %31 = dma.hbm_to_vmem [thread:$0]  %s2, 16, %s29, [#allocation3]
    $region13: #{tpu_custom_call.1} parent=1 // pred_fallthru
      _
    // Predicated region
    $region14: #{tpu_custom_call.1} parent=1 // pred_check
      _
    $region15: #{tpu_custom_call.1} parent=1 // pred_check_branch
      %33 = sbr.rel (0) target = $region17
    $region16: #{tpu_custom_call.1} parent=1 // pred_region
      _
    $region17: #{tpu_custom_call.1} parent=1 // pred_fallthru
      _
    // Predicated region
    $region18: #{tpu_custom_call.1} parent=1 // pred_check
      _
    $region19: #{tpu_custom_call.1} parent=1 // pred_check_branch
      %35 = sbr.rel (0) target = $region21
    $region20: #{tpu_custom_call.1} parent=1 // pred_region
      %s37 = ssub.s32 16, 16
      %38 = vsyncadd [#allocation6], %s37
      %s40 = sshll.u32 [#allocation5], 4
      %s41 = int_to_ptr.vmem [resolvable:$true] %s40
      %43 = dma.hbm_to_vmem [thread:$0]  %s4, 16, %s41, [#allocation6]
    $region21: #{tpu_custom_call.1} parent=1 // pred_fallthru
      _
    // Predicated region
    $region22: #{tpu_custom_call.1} parent=1 // pred_check
      _
    $region23: #{tpu_custom_call.1} parent=1 // pred_check_branch
      %45 = sbr.rel (0) target = $region25
    $region24: #{tpu_custom_call.1} parent=1 // pred_region
      %s47 = ssub.s32 2048, 2048
      %48 = vsyncadd [#allocation6], %s47
      %s49 = sshll.u32 [#allocation7], 4
      %s50 = int_to_ptr.vmem [resolvable:$true] %s49
      %55 = dma.hbm_to_vmem [thread:$0]  %s5, 2048, %s50, [#allocation6], 256, 256, 16
    $region25: #{tpu_custom_call.1} parent=1 // pred_fallthru
      _
    // Predicated region
    $region26: #{tpu_custom_call.1} parent=1 // pred_check
      _
    $region27: #{tpu_custom_call.1} parent=1 // pred_check_branch
      %57 = sbr.rel (0) target = $region29
    $region28: #{tpu_custom_call.1} parent=1 // pred_region
      _
    $region29: #{tpu_custom_call.1} parent=1 // pred_fallthru
      _
    // Predicated region
    $region30: #{tpu_custom_call.1} parent=1 // pred_check
      _
    $region31: #{tpu_custom_call.1} parent=1 // pred_check_branch
      %59 = sbr.rel (0) target = $region33
    $region32: #{tpu_custom_call.1} parent=1 // pred_region
      %s61 = ssub.s32 28672, 28672
      %62 = vsyncadd [#allocation9], %s61
      %s63 = sshll.u32 [#allocation8], 4
      %s64 = int_to_ptr.vmem [resolvable:$true] %s63
      %69 = dma.hbm_to_vmem [thread:$0]  %s7, 28672, %s64, [#allocation9], 896, 896, 56
    $region33: #{tpu_custom_call.1} parent=1 // pred_fallthru
      _
    // Predicated region
    $region34: #{tpu_custom_call.1} parent=1 // pred_check
      _
    $region35: #{tpu_custom_call.1} parent=1 // pred_check_branch
      %71 = sbr.rel (0) target = $region37
    $region36: #{tpu_custom_call.1} parent=1 // pred_region
      _
    $region37: #{tpu_custom_call.1} parent=1 // pred_fallthru
      _
    // Predicated region
    $region38: #{tpu_custom_call.1} parent=1 // pred_check
      _
    $region39: #{tpu_custom_call.1} parent=1 // pred_check_branch
      %73 = sbr.rel (0) target = $region41
    $region40: #{tpu_custom_call.1} parent=1 // pred_region
      %74 = dma.done [#allocation3], 16
    $region41: #{tpu_custom_call.1} parent=1 // pred_fallthru
      _
    // Predicated region
    $region42: #{tpu_custom_call.1} parent=1 // pred_check
      _
    $region43: #{tpu_custom_call.1} parent=1 // pred_check_branch
      %76 = sbr.rel (0) target = $region45
    $region44: #{tpu_custom_call.1} parent=1 // pred_region
      %77 = dma.done [#allocation6], 16
    $region45: #{tpu_custom_call.1} parent=1 // pred_fallthru
      _
    // Predicated region
    $region46: #{tpu_custom_call.1} parent=1 // pred_check
      _
    $region47: #{tpu_custom_call.1} parent=1 // pred_check_branch
      %79 = sbr.rel (0) target = $region49
    $region48: #{tpu_custom_call.1} parent=1 // pred_region
      %80 = dma.done [#allocation6], 2048
    $region49: #{tpu_custom_call.1} parent=1 // pred_fallthru
      _
    // Predicated region
    $region50: #{tpu_custom_call.1} parent=1 // pred_check
      _
    $region51: #{tpu_custom_call.1} parent=1 // pred_check_branch
      %82 = sbr.rel (0) target = $region53
    $region52: #{tpu_custom_call.1} parent=1 // pred_region
      %83 = dma.done [#allocation9], 28672
    $region53: #{tpu_custom_call.1} parent=1 // pred_fallthru
      _
    %v84 = vld [vmem:[%s0] sm:$0xff]
    %v85 = vld [vmem:[%s1] sm:$0x1]
    %87 = vset.pattern.permute.xlu0 0
    %88 = vperm.xlu0 %87, %v84
    %v89 = vpop.permute.xlu0 %88
    %v91 = vlaneseq
    %v92 = vshrl.u32 %v91, 7
    %v93 = vsub.s32 0, %v92
    %v94 = vrot.slane %v85, %v93
    %v95 = vmul.f32 %v89, %v94
    %v96 = vld [vmem:[%s1 + $0x1] sm:$0x1]
    %97 = vset.pattern.permute.xlu0 1
    %98 = vperm.xlu0 %97, %v84
    %v99 = vpop.permute.xlu0 %98
    %v101 = vlaneseq
    %v102 = vshrl.u32 %v101, 7
    %v103 = vsub.s32 0, %v102
    %v104 = vrot.slane %v96, %v103
    %v105 = vmul.f32 %v99, %v104
    %v106 = vadd.f32 %v95, %v105
    %v107 = vld [vmem:[#allocation2] sm:$0x1]
    %v109 = vlaneseq
    %v110 = vshrl.u32 %v109, 7
    %v111 = vsub.s32 0, %v110
    %v112 = vrot.slane %v107, %v111
    %v114 = vadd.f32 %v106, %v112
    %v115 = vmax.f32 %v114, 0.0
    %v116 = vld [vmem:[%s3] sm:$0xff]
    %v117 = vld [vmem:[%s3 + $0x8] sm:$0xff]
    %v118 = vld [vmem:[#allocation5] sm:$0x1]
    %v120 = vlaneseq
    %v121 = vshrl.u32 %v120, 7
    %v122 = vsub.s32 0, %v121
    %v123 = vrot.slane %v118, %v122
    %vm125 = vcmask 130048
    %v127 = vsel %vm125, %v115, 0
    %129 = vmatprep.subr.mxu0 0.0
    %130 = vmatpush1.msra.mxu0 %v116
    %131 = vmatprep.subr.mxu0 0.0
    %132 = vmatpush1.msra.mxu0 %v117
    %133 = vmatprep.subr.mxu0 0.0
    %134 = vmatpush1.msra.mxu0 0.0
    %135 = vmatprep.subr.mxu0 0.0
    %136 = vmatpush1.msra.mxu0 0.0
    %137 = vmatprep.subr.mxu0 0.0
    %138 = vmatpush1.msra.mxu0 0.0
    %139 = vmatprep.subr.mxu0 0.0
    %140 = vmatpush1.msra.mxu0 0.0
    %141 = vmatprep.subr.mxu0 0.0
    %142 = vmatpush1.msra.mxu0 0.0
    %143 = vmatprep.subr.mxu0 0.0
    %144 = vmatpush1.msra.mxu0 0.0
    %145 = vmatprep.subr.mxu0 0.0
    %146 = vmatpush1.msra.mxu0 0.0
    %147 = vmatprep.subr.mxu0 0.0
    %148 = vmatpush1.msra.mxu0 0.0
    %149 = vmatprep.subr.mxu0 0.0
    %150 = vmatpush1.msra.mxu0 0.0
    %151 = vmatprep.subr.mxu0 0.0
    %152 = vmatpush1.msra.mxu0 0.0
    %153 = vmatprep.subr.mxu0 0.0
    %154 = vmatpush1.msra.mxu0 0.0
    %155 = vmatprep.subr.mxu0 0.0
    %156 = vmatpush1.msra.mxu0 0.0
    %157 = vmatprep.subr.mxu0 0.0
    %158 = vmatpush1.msra.mxu0 0.0
    %159 = vmatprep.subr.mxu0 0.0
    %160 = vmatpush1.msra.mxu0 0.0
    %161 = vmatprep.subr.mxu0 0.0
    %162 = vmatpush1.msra.mxu0 0.0
    %163 = vmatprep.subr.mxu0 0.0
    %164 = vmatpush1.msra.mxu0 0.0
    %165 = vmatprep.subr.mxu0 0.0
    %166 = vmatpush1.msra.mxu0 0.0
    %167 = vmatprep.subr.mxu0 0.0
    %168 = vmatpush1.msra.mxu0 0.0
    %169 = vmatprep.subr.mxu0 0.0
    %170 = vmatpush1.msra.mxu0 0.0
    %171 = vmatprep.subr.mxu0 0.0
    %172 = vmatpush1.msra.mxu0 0.0
    %173 = vmatprep.subr.mxu0 0.0
    %174 = vmatpush1.msra.mxu0 0.0
    %175 = vmatprep.subr.mxu0 0.0
    %176 = vmatpush1.msra.mxu0 0.0
    %177 = vmatprep.subr.mxu0 0.0
    %178 = vmatpush1.msra.mxu0 0.0
    %179 = vmatprep.subr.mxu0 0.0
    %180 = vmatpush1.msra.mxu0 0.0
    %181 = vmatprep.subr.mxu0 0.0
    %182 = vmatpush1.msra.mxu0 0.0
    %183 = vmatprep.subr.mxu0 0.0
    %184 = vmatpush1.msra.mxu0 0.0
    %185 = vmatprep.subr.mxu0 0.0
    %186 = vmatpush1.msra.mxu0 0.0
    %187 = vmatprep.subr.mxu0 0.0
    %188 = vmatpush1.msra.mxu0 0.0
    %189 = vmatprep.subr.mxu0 0.0
    %190 = vmatpush1.msra.mxu0 0.0
    %191 = vmatprep.subr.mxu0 0.0
    %192 = vmatpush1.msra.mxu0 0.0
    %193 = vmatprep.mubr.f32.mxu0 0.0
    %194 = vmatmul.mubr.f32.gmra.mrb[0].mxu0 %v127
    %v195 = vpop.f32.mrb[0].mxu0
    %v196 = vadd.f32 %v123, %v195
    %v197 = vpop.f32.mrb[0].mxu0
    %198 = vdwg.mxu0
    %v199 = vmax.f32 %v196, 0.0
    %v200 = vld [vmem:[#allocation7] sm:$0xff]
    %v201 = vld [vmem:[#allocation7 + $0x8] sm:$0xff]
    %v202 = vld [vmem:[#allocation7 + $0x10] sm:$0xff]
    %v203 = vld [vmem:[#allocation7 + $0x18] sm:$0xff]
    %v204 = vld [vmem:[#allocation7 + $0x20] sm:$0xff]
    %v205 = vld [vmem:[#allocation7 + $0x28] sm:$0xff]
    %v206 = vld [vmem:[#allocation7 + $0x30] sm:$0xff]
    %v207 = vld [vmem:[#allocation7 + $0x38] sm:$0xff]
    %v208 = vld [vmem:[#allocation7 + $0x40] sm:$0xff]
    %v209 = vld [vmem:[#allocation7 + $0x48] sm:$0xff]
    %v210 = vld [vmem:[#allocation7 + $0x50] sm:$0xff]
    %v211 = vld [vmem:[#allocation7 + $0x58] sm:$0xff]
    %v212 = vld [vmem:[#allocation7 + $0x60] sm:$0xff]
    %v213 = vld [vmem:[#allocation7 + $0x68] sm:$0xff]
    %v214 = vld [vmem:[#allocation7 + $0x70] sm:$0xff]
    %v215 = vld [vmem:[#allocation7 + $0x78] sm:$0xff]
    %v216 = vld [vmem:[%s6] sm:$0x3]
    %v218 = vlaneseq
    %v219 = vshrl.u32 %v218, 7
    %v220 = vsub.s32 0, %v219
    %v221 = vrot.slane %v216, %v220
    %v222 = vlaneseq
    %v223 = vshrl.u32 %v222, 7
    %v224 = vsub.s32 1, %v223
    %v225 = vrot.slane %v216, %v224
    %vm228 = vcmask 523264
    %v230 = vsel %vm228, %v199, 0
    %232 = vmatprep.subr.mxu0 %v201
    %233 = vmatpush1.msra.mxu0 %v200
    %234 = vmatprep.subr.mxu0 %v203
    %235 = vmatpush1.msra.mxu0 %v202
    %236 = vmatprep.subr.mxu0 %v205
    %237 = vmatpush1.msra.mxu0 %v204
    %238 = vmatprep.subr.mxu0 %v207
    %239 = vmatpush1.msra.mxu0 %v206
    %240 = vmatprep.subr.mxu0 %v209
    %241 = vmatpush1.msra.mxu0 %v208
    %242 = vmatprep.subr.mxu0 %v211
    %243 = vmatpush1.msra.mxu0 %v210
    %244 = vmatprep.subr.mxu0 %v213
    %245 = vmatpush1.msra.mxu0 %v212
    %246 = vmatprep.subr.mxu0 %v215
    %247 = vmatpush1.msra.mxu0 %v214
    %248 = vmatprep.subr.mxu0 0.0
    %249 = vmatpush1.msra.mxu0 0.0
    %250 = vmatprep.subr.mxu0 0.0
    %251 = vmatpush1.msra.mxu0 0.0
    %252 = vmatprep.subr.mxu0 0.0
    %253 = vmatpush1.msra.mxu0 0.0
    %254 = vmatprep.subr.mxu0 0.0
    %255 = vmatpush1.msra.mxu0 0.0
    %256 = vmatprep.subr.mxu0 0.0
    %257 = vmatpush1.msra.mxu0 0.0
    %258 = vmatprep.subr.mxu0 0.0
    %259 = vmatpush1.msra.mxu0 0.0
    %260 = vmatprep.subr.mxu0 0.0
    %261 = vmatpush1.msra.mxu0 0.0
    %262 = vmatprep.subr.mxu0 0.0
    %263 = vmatpush1.msra.mxu0 0.0
    %264 = vmatprep.subr.mxu0 0.0
    %265 = vmatpush1.msra.mxu0 0.0
    %266 = vmatprep.subr.mxu0 0.0
    %267 = vmatpush1.msra.mxu0 0.0
    %268 = vmatprep.subr.mxu0 0.0
    %269 = vmatpush1.msra.mxu0 0.0
    %270 = vmatprep.subr.mxu0 0.0
    %271 = vmatpush1.msra.mxu0 0.0
    %272 = vmatprep.subr.mxu0 0.0
    %273 = vmatpush1.msra.mxu0 0.0
    %274 = vmatprep.subr.mxu0 0.0
    %275 = vmatpush1.msra.mxu0 0.0
    %276 = vmatprep.subr.mxu0 0.0
    %277 = vmatpush1.msra.mxu0 0.0
    %278 = vmatprep.subr.mxu0 0.0
    %279 = vmatpush1.msra.mxu0 0.0
    %280 = vmatprep.subr.mxu0 0.0
    %281 = vmatpush1.msra.mxu0 0.0
    %282 = vmatprep.subr.mxu0 0.0
    %283 = vmatpush1.msra.mxu0 0.0
    %284 = vmatprep.subr.mxu0 0.0
    %285 = vmatpush1.msra.mxu0 0.0
    %286 = vmatprep.subr.mxu0 0.0
    %287 = vmatpush1.msra.mxu0 0.0
    %288 = vmatprep.subr.mxu0 0.0
    %289 = vmatpush1.msra.mxu0 0.0
    %290 = vmatprep.subr.mxu0 0.0
    %291 = vmatpush1.msra.mxu0 0.0
    %292 = vmatprep.subr.mxu0 0.0
    %293 = vmatpush1.msra.mxu0 0.0
    %294 = vmatprep.subr.mxu0 0.0
    %295 = vmatpush1.msra.mxu0 0.0
    %296 = vmatprep.mubr.f32.mxu0 0.0
    %297 = vmatmul.mubr.f32.gmra.mrb[0].mxu0 %v230
    %v298 = vpop.f32.mrb[0].mxu0
    %v299 = vadd.f32 %v221, %v298
    %v300 = vpop.f32.mrb[0].mxu0
    %v301 = vadd.f32 %v225, %v300
    %302 = vdwg.mxu0
    %v303 = vmax.f32 %v299, 0.0
    %v304 = vmax.f32 %v301, 0.0
    %v305 = vld [vmem:[#allocation8] sm:$0xff]
    %v306 = vld [vmem:[#allocation8 + $0x8] sm:$0xff]
    %v307 = vld [vmem:[#allocation8 + $0x10] sm:$0xff]
    %v308 = vld [vmem:[#allocation8 + $0x18] sm:$0xff]
    %v309 = vld [vmem:[#allocation8 + $0x20] sm:$0xff]
    %v310 = vld [vmem:[#allocation8 + $0x28] sm:$0xff]
    %v311 = vld [vmem:[#allocation8 + $0x30] sm:$0xff]
    %v312 = vld [vmem:[#allocation8 + $0x38] sm:$0xff]
    %v313 = vld [vmem:[#allocation8 + $0x40] sm:$0xff]
    %v314 = vld [vmem:[#allocation8 + $0x48] sm:$0xff]
    %v315 = vld [vmem:[#allocation8 + $0x50] sm:$0xff]
    %v316 = vld [vmem:[#allocation8 + $0x58] sm:$0xff]
    %v317 = vld [vmem:[#allocation8 + $0x60] sm:$0xff]
    %v318 = vld [vmem:[#allocation8 + $0x68] sm:$0xff]
    %v319 = vld [vmem:[#allocation8 + $0x70] sm:$0xff]
    %v320 = vld [vmem:[#allocation8 + $0x78] sm:$0xff]
    %v321 = vld [vmem:[#allocation8 + $0x80] sm:$0xff]
    %v322 = vld [vmem:[#allocation8 + $0x88] sm:$0xff]
    %v323 = vld [vmem:[#allocation8 + $0x90] sm:$0xff]
    %v324 = vld [vmem:[#allocation8 + $0x98] sm:$0xff]
    %v325 = vld [vmem:[#allocation8 + $0xa0] sm:$0xff]
    %v326 = vld [vmem:[#allocation8 + $0xa8] sm:$0xff]
    %v327 = vld [vmem:[#allocation8 + $0xb0] sm:$0xff]
    %v328 = vld [vmem:[#allocation8 + $0xb8] sm:$0xff]
    %v329 = vld [vmem:[#allocation8 + $0xc0] sm:$0xff]
    %v330 = vld [vmem:[#allocation8 + $0xc8] sm:$0xff]
    %v331 = vld [vmem:[#allocation8 + $0xd0] sm:$0xff]
    %v332 = vld [vmem:[#allocation8 + $0xd8] sm:$0xff]
    %v333 = vld [vmem:[#allocation8 + $0xe0] sm:$0xff]
    %v334 = vld [vmem:[#allocation8 + $0xe8] sm:$0xff]
    %v335 = vld [vmem:[#allocation8 + $0xf0] sm:$0xff]
    %v336 = vld [vmem:[#allocation8 + $0xf8] sm:$0xff]
    %v337 = vld [vmem:[#allocation8 + $0x100] sm:$0xff]
    %v338 = vld [vmem:[#allocation8 + $0x108] sm:$0xff]
    %v339 = vld [vmem:[#allocation8 + $0x110] sm:$0xff]
    %v340 = vld [vmem:[#allocation8 + $0x118] sm:$0xff]
    %v341 = vld [vmem:[#allocation8 + $0x120] sm:$0xff]
    %v342 = vld [vmem:[#allocation8 + $0x128] sm:$0xff]
    %v343 = vld [vmem:[#allocation8 + $0x130] sm:$0xff]
    %v344 = vld [vmem:[#allocation8 + $0x138] sm:$0xff]
    %v345 = vld [vmem:[#allocation8 + $0x140] sm:$0xff]
    %v346 = vld [vmem:[#allocation8 + $0x148] sm:$0xff]
    %v347 = vld [vmem:[#allocation8 + $0x150] sm:$0xff]
    %v348 = vld [vmem:[#allocation8 + $0x158] sm:$0xff]
    %v349 = vld [vmem:[#allocation8 + $0x160] sm:$0xff]
    %v350 = vld [vmem:[#allocation8 + $0x168] sm:$0xff]
    %v351 = vld [vmem:[#allocation8 + $0x170] sm:$0xff]
    %v352 = vld [vmem:[#allocation8 + $0x178] sm:$0xff]
    %v353 = vld [vmem:[#allocation8 + $0x180] sm:$0xff]
    %v354 = vld [vmem:[#allocation8 + $0x188] sm:$0xff]
    %v355 = vld [vmem:[#allocation8 + $0x190] sm:$0xff]
    %v356 = vld [vmem:[#allocation8 + $0x198] sm:$0xff]
    %v357 = vld [vmem:[#allocation8 + $0x1a0] sm:$0xff]
    %v358 = vld [vmem:[#allocation8 + $0x1a8] sm:$0xff]
    %v359 = vld [vmem:[#allocation8 + $0x1b0] sm:$0xff]
    %v360 = vld [vmem:[#allocation8 + $0x1b8] sm:$0xff]
    %v361 = vld [vmem:[#allocation8 + $0x1c0] sm:$0xff]
    %v362 = vld [vmem:[#allocation8 + $0x1c8] sm:$0xff]
    %v363 = vld [vmem:[#allocation8 + $0x1d0] sm:$0xff]
    %v364 = vld [vmem:[#allocation8 + $0x1d8] sm:$0xff]
    %v365 = vld [vmem:[#allocation8 + $0x1e0] sm:$0xff]
    %v366 = vld [vmem:[#allocation8 + $0x1e8] sm:$0xff]
    %v367 = vld [vmem:[#allocation8 + $0x1f0] sm:$0xff]
    %v368 = vld [vmem:[#allocation8 + $0x1f8] sm:$0xff]
    %v369 = vld [vmem:[#allocation8 + $0x200] sm:$0xff]
    %v370 = vld [vmem:[#allocation8 + $0x208] sm:$0xff]
    %v371 = vld [vmem:[#allocation8 + $0x210] sm:$0xff]
    %v372 = vld [vmem:[#allocation8 + $0x218] sm:$0xff]
    %v373 = vld [vmem:[#allocation8 + $0x220] sm:$0xff]
    %v374 = vld [vmem:[#allocation8 + $0x228] sm:$0xff]
    %v375 = vld [vmem:[#allocation8 + $0x230] sm:$0xff]
    %v376 = vld [vmem:[#allocation8 + $0x238] sm:$0xff]
    %v377 = vld [vmem:[#allocation8 + $0x240] sm:$0xff]
    %v378 = vld [vmem:[#allocation8 + $0x248] sm:$0xff]
    %v379 = vld [vmem:[#allocation8 + $0x250] sm:$0xff]
    %v380 = vld [vmem:[#allocation8 + $0x258] sm:$0xff]
    %v381 = vld [vmem:[#allocation8 + $0x260] sm:$0xff]
    %v382 = vld [vmem:[#allocation8 + $0x268] sm:$0xff]
    %v383 = vld [vmem:[#allocation8 + $0x270] sm:$0xff]
    %v384 = vld [vmem:[#allocation8 + $0x278] sm:$0xff]
    %v385 = vld [vmem:[#allocation8 + $0x280] sm:$0xff]
    %v386 = vld [vmem:[#allocation8 + $0x288] sm:$0xff]
    %v387 = vld [vmem:[#allocation8 + $0x290] sm:$0xff]
    %v388 = vld [vmem:[#allocation8 + $0x298] sm:$0xff]
    %v389 = vld [vmem:[#allocation8 + $0x2a0] sm:$0xff]
    %v390 = vld [vmem:[#allocation8 + $0x2a8] sm:$0xff]
    %v391 = vld [vmem:[#allocation8 + $0x2b0] sm:$0xff]
    %v392 = vld [vmem:[#allocation8 + $0x2b8] sm:$0xff]
    %v393 = vld [vmem:[#allocation8 + $0x2c0] sm:$0xff]
    %v394 = vld [vmem:[#allocation8 + $0x2c8] sm:$0xff]
    %v395 = vld [vmem:[#allocation8 + $0x2d0] sm:$0xff]
    %v396 = vld [vmem:[#allocation8 + $0x2d8] sm:$0xff]
    %v397 = vld [vmem:[#allocation8 + $0x2e0] sm:$0xff]
    %v398 = vld [vmem:[#allocation8 + $0x2e8] sm:$0xff]
    %v399 = vld [vmem:[#allocation8 + $0x2f0] sm:$0xff]
    %v400 = vld [vmem:[#allocation8 + $0x2f8] sm:$0xff]
    %v401 = vld [vmem:[#allocation8 + $0x300] sm:$0xff]
    %v402 = vld [vmem:[#allocation8 + $0x308] sm:$0xff]
    %v403 = vld [vmem:[#allocation8 + $0x310] sm:$0xff]
    %v404 = vld [vmem:[#allocation8 + $0x318] sm:$0xff]
    %v405 = vld [vmem:[#allocation8 + $0x320] sm:$0xff]
    %v406 = vld [vmem:[#allocation8 + $0x328] sm:$0xff]
    %v407 = vld [vmem:[#allocation8 + $0x330] sm:$0xff]
    %v408 = vld [vmem:[#allocation8 + $0x338] sm:$0xff]
    %v409 = vld [vmem:[#allocation8 + $0x340] sm:$0xff]
    %v410 = vld [vmem:[#allocation8 + $0x348] sm:$0xff]
    %v411 = vld [vmem:[#allocation8 + $0x350] sm:$0xff]
    %v412 = vld [vmem:[#allocation8 + $0x358] sm:$0xff]
    %v413 = vld [vmem:[#allocation8 + $0x360] sm:$0xff]
    %v414 = vld [vmem:[#allocation8 + $0x368] sm:$0xff]
    %v415 = vld [vmem:[#allocation8 + $0x370] sm:$0xff]
    %v416 = vld [vmem:[#allocation8 + $0x378] sm:$0xff]
    %v417 = vld [vmem:[#allocation8 + $0x380] sm:$0xff]
    %v418 = vld [vmem:[#allocation8 + $0x388] sm:$0xff]
    %v419 = vld [vmem:[#allocation8 + $0x390] sm:$0xff]
    %v420 = vld [vmem:[#allocation8 + $0x398] sm:$0xff]
    %v421 = vld [vmem:[#allocation8 + $0x3a0] sm:$0xff]
    %v422 = vld [vmem:[#allocation8 + $0x3a8] sm:$0xff]
    %v423 = vld [vmem:[#allocation8 + $0x3b0] sm:$0xff]
    %v424 = vld [vmem:[#allocation8 + $0x3b8] sm:$0xff]
    %v425 = vld [vmem:[#allocation8 + $0x3c0] sm:$0xff]
    %v426 = vld [vmem:[#allocation8 + $0x3c8] sm:$0xff]
    %v427 = vld [vmem:[#allocation8 + $0x3d0] sm:$0xff]
    %v428 = vld [vmem:[#allocation8 + $0x3d8] sm:$0xff]
    %v429 = vld [vmem:[#allocation8 + $0x3e0] sm:$0xff]
    %v430 = vld [vmem:[#allocation8 + $0x3e8] sm:$0xff]
    %v431 = vld [vmem:[#allocation8 + $0x3f0] sm:$0xff]
    %v432 = vld [vmem:[#allocation8 + $0x3f8] sm:$0xff]
    %v433 = vld [vmem:[#allocation8 + $0x400] sm:$0xff]
    %v434 = vld [vmem:[#allocation8 + $0x408] sm:$0xff]
    %v435 = vld [vmem:[#allocation8 + $0x410] sm:$0xff]
    %v436 = vld [vmem:[#allocation8 + $0x418] sm:$0xff]
    %v437 = vld [vmem:[#allocation8 + $0x420] sm:$0xff]
    %v438 = vld [vmem:[#allocation8 + $0x428] sm:$0xff]
    %v439 = vld [vmem:[#allocation8 + $0x430] sm:$0xff]
    %v440 = vld [vmem:[#allocation8 + $0x438] sm:$0xff]
    %v441 = vld [vmem:[#allocation8 + $0x440] sm:$0xff]
    %v442 = vld [vmem:[#allocation8 + $0x448] sm:$0xff]
    %v443 = vld [vmem:[#allocation8 + $0x450] sm:$0xff]
    %v444 = vld [vmem:[#allocation8 + $0x458] sm:$0xff]
    %v445 = vld [vmem:[#allocation8 + $0x460] sm:$0xff]
    %v446 = vld [vmem:[#allocation8 + $0x468] sm:$0xff]
    %v447 = vld [vmem:[#allocation8 + $0x470] sm:$0xff]
    %v448 = vld [vmem:[#allocation8 + $0x478] sm:$0xff]
    %v449 = vld [vmem:[#allocation8 + $0x480] sm:$0xff]
    %v450 = vld [vmem:[#allocation8 + $0x488] sm:$0xff]
    %v451 = vld [vmem:[#allocation8 + $0x490] sm:$0xff]
    %v452 = vld [vmem:[#allocation8 + $0x498] sm:$0xff]
    %v453 = vld [vmem:[#allocation8 + $0x4a0] sm:$0xff]
    %v454 = vld [vmem:[#allocation8 + $0x4a8] sm:$0xff]
    %v455 = vld [vmem:[#allocation8 + $0x4b0] sm:$0xff]
    %v456 = vld [vmem:[#allocation8 + $0x4b8] sm:$0xff]
    %v457 = vld [vmem:[#allocation8 + $0x4c0] sm:$0xff]
    %v458 = vld [vmem:[#allocation8 + $0x4c8] sm:$0xff]
    %v459 = vld [vmem:[#allocation8 + $0x4d0] sm:$0xff]
    %v460 = vld [vmem:[#allocation8 + $0x4d8] sm:$0xff]
    %v461 = vld [vmem:[#allocation8 + $0x4e0] sm:$0xff]
    %v462 = vld [vmem:[#allocation8 + $0x4e8] sm:$0xff]
    %v463 = vld [vmem:[#allocation8 + $0x4f0] sm:$0xff]
    %v464 = vld [vmem:[#allocation8 + $0x4f8] sm:$0xff]
    %v465 = vld [vmem:[#allocation8 + $0x500] sm:$0xff]
    %v466 = vld [vmem:[#allocation8 + $0x508] sm:$0xff]
    %v467 = vld [vmem:[#allocation8 + $0x510] sm:$0xff]
    %v468 = vld [vmem:[#allocation8 + $0x518] sm:$0xff]
    %v469 = vld [vmem:[#allocation8 + $0x520] sm:$0xff]
    %v470 = vld [vmem:[#allocation8 + $0x528] sm:$0xff]
    %v471 = vld [vmem:[#allocation8 + $0x530] sm:$0xff]
    %v472 = vld [vmem:[#allocation8 + $0x538] sm:$0xff]
    %v473 = vld [vmem:[#allocation8 + $0x540] sm:$0xff]
    %v474 = vld [vmem:[#allocation8 + $0x548] sm:$0xff]
    %v475 = vld [vmem:[#allocation8 + $0x550] sm:$0xff]
    %v476 = vld [vmem:[#allocation8 + $0x558] sm:$0xff]
    %v477 = vld [vmem:[#allocation8 + $0x560] sm:$0xff]
    %v478 = vld [vmem:[#allocation8 + $0x568] sm:$0xff]
    %v479 = vld [vmem:[#allocation8 + $0x570] sm:$0xff]
    %v480 = vld [vmem:[#allocation8 + $0x578] sm:$0xff]
    %v481 = vld [vmem:[#allocation8 + $0x580] sm:$0xff]
    %v482 = vld [vmem:[#allocation8 + $0x588] sm:$0xff]
    %v483 = vld [vmem:[#allocation8 + $0x590] sm:$0xff]
    %v484 = vld [vmem:[#allocation8 + $0x598] sm:$0xff]
    %v485 = vld [vmem:[#allocation8 + $0x5a0] sm:$0xff]
    %v486 = vld [vmem:[#allocation8 + $0x5a8] sm:$0xff]
    %v487 = vld [vmem:[#allocation8 + $0x5b0] sm:$0xff]
    %v488 = vld [vmem:[#allocation8 + $0x5b8] sm:$0xff]
    %v489 = vld [vmem:[#allocation8 + $0x5c0] sm:$0xff]
    %v490 = vld [vmem:[#allocation8 + $0x5c8] sm:$0xff]
    %v491 = vld [vmem:[#allocation8 + $0x5d0] sm:$0xff]
    %v492 = vld [vmem:[#allocation8 + $0x5d8] sm:$0xff]
    %v493 = vld [vmem:[#allocation8 + $0x5e0] sm:$0xff]
    %v494 = vld [vmem:[#allocation8 + $0x5e8] sm:$0xff]
    %v495 = vld [vmem:[#allocation8 + $0x5f0] sm:$0xff]
    %v496 = vld [vmem:[#allocation8 + $0x5f8] sm:$0xff]
    %v497 = vld [vmem:[#allocation8 + $0x600] sm:$0xff]
    %v498 = vld [vmem:[#allocation8 + $0x608] sm:$0xff]
    %v499 = vld [vmem:[#allocation8 + $0x610] sm:$0xff]
    %v500 = vld [vmem:[#allocation8 + $0x618] sm:$0xff]
    %v501 = vld [vmem:[#allocation8 + $0x620] sm:$0xff]
    %v502 = vld [vmem:[#allocation8 + $0x628] sm:$0xff]
    %v503 = vld [vmem:[#allocation8 + $0x630] sm:$0xff]
    %v504 = vld [vmem:[#allocation8 + $0x638] sm:$0xff]
    %v505 = vld [vmem:[#allocation8 + $0x640] sm:$0xff]
    %v506 = vld [vmem:[#allocation8 + $0x648] sm:$0xff]
    %v507 = vld [vmem:[#allocation8 + $0x650] sm:$0xff]
    %v508 = vld [vmem:[#allocation8 + $0x658] sm:$0xff]
    %v509 = vld [vmem:[#allocation8 + $0x660] sm:$0xff]
    %v510 = vld [vmem:[#allocation8 + $0x668] sm:$0xff]
    %v511 = vld [vmem:[#allocation8 + $0x670] sm:$0xff]
    %v512 = vld [vmem:[#allocation8 + $0x678] sm:$0xff]
    %v513 = vld [vmem:[#allocation8 + $0x680] sm:$0xff]
    %v514 = vld [vmem:[#allocation8 + $0x688] sm:$0xff]
    %v515 = vld [vmem:[#allocation8 + $0x690] sm:$0xff]
    %v516 = vld [vmem:[#allocation8 + $0x698] sm:$0xff]
    %v517 = vld [vmem:[#allocation8 + $0x6a0] sm:$0xff]
    %v518 = vld [vmem:[#allocation8 + $0x6a8] sm:$0xff]
    %v519 = vld [vmem:[#allocation8 + $0x6b0] sm:$0xff]
    %v520 = vld [vmem:[#allocation8 + $0x6b8] sm:$0xff]
    %v521 = vld [vmem:[#allocation8 + $0x6c0] sm:$0xff]
    %v522 = vld [vmem:[#allocation8 + $0x6c8] sm:$0xff]
    %v523 = vld [vmem:[#allocation8 + $0x6d0] sm:$0xff]
    %v524 = vld [vmem:[#allocation8 + $0x6d8] sm:$0xff]
    %v525 = vld [vmem:[#allocation8 + $0x6e0] sm:$0xff]
    %v526 = vld [vmem:[#allocation8 + $0x6e8] sm:$0xff]
    %v527 = vld [vmem:[#allocation8 + $0x6f0] sm:$0xff]
    %v528 = vld [vmem:[#allocation8 + $0x6f8] sm:$0xff]
    %v529 = vld [vmem:[%s8] sm:$0xff]
    %v531 = vlaneseq
    %v532 = vshrl.u32 %v531, 7
    %v533 = vsub.s32 0, %v532
    %v534 = vrot.slane %v529, %v533
    %v535 = vlaneseq
    %v536 = vshrl.u32 %v535, 7
    %v537 = vsub.s32 1, %v536
    %v538 = vrot.slane %v529, %v537
    %v539 = vlaneseq
    %v540 = vshrl.u32 %v539, 7
    %v541 = vsub.s32 2, %v540
    %v542 = vrot.slane %v529, %v541
    %v543 = vlaneseq
    %v544 = vshrl.u32 %v543, 7
    %v545 = vsub.s32 3, %v544
    %v546 = vrot.slane %v529, %v545
    %v547 = vlaneseq
    %v548 = vshrl.u32 %v547, 7
    %v549 = vsub.s32 4, %v548
    %v550 = vrot.slane %v529, %v549
    %v551 = vlaneseq
    %v552 = vshrl.u32 %v551, 7
    %v553 = vsub.s32 5, %v552
    %v554 = vrot.slane %v529, %v553
    %v555 = vlaneseq
    %v556 = vshrl.u32 %v555, 7
    %v557 = vsub.s32 6, %v556
    %v558 = vrot.slane %v529, %v557
    %566 = vmatprep.subr.mxu0 %v306
    %567 = vmatpush1.msra.mxu0 %v305
    %568 = vmatprep.subr.mxu0 %v313
    %569 = vmatpush1.msra.mxu0 %v312
    %570 = vmatprep.subr.mxu0 %v320
    %571 = vmatpush1.msra.mxu0 %v319
    %572 = vmatprep.subr.mxu0 %v327
    %573 = vmatpush1.msra.mxu0 %v326
    %574 = vmatprep.subr.mxu0 %v334
    %575 = vmatpush1.msra.mxu0 %v333
    %576 = vmatprep.subr.mxu0 %v341
    %577 = vmatpush1.msra.mxu0 %v340
    %578 = vmatprep.subr.mxu0 %v348
    %579 = vmatpush1.msra.mxu0 %v347
    %580 = vmatprep.subr.mxu0 %v355
    %581 = vmatpush1.msra.mxu0 %v354
    %582 = vmatprep.subr.mxu0 %v362
    %583 = vmatpush1.msra.mxu0 %v361
    %584 = vmatprep.subr.mxu0 %v369
    %585 = vmatpush1.msra.mxu0 %v368
    %586 = vmatprep.subr.mxu0 %v376
    %587 = vmatpush1.msra.mxu0 %v375
    %588 = vmatprep.subr.mxu0 %v383
    %589 = vmatpush1.msra.mxu0 %v382
    %590 = vmatprep.subr.mxu0 %v390
    %591 = vmatpush1.msra.mxu0 %v389
    %592 = vmatprep.subr.mxu0 %v397
    %593 = vmatpush1.msra.mxu0 %v396
    %594 = vmatprep.subr.mxu0 %v404
    %595 = vmatpush1.msra.mxu0 %v403
    %596 = vmatprep.subr.mxu0 %v411
    %597 = vmatpush1.msra.mxu0 %v410
    %598 = vmatprep.subr.mxu0 %v418
    %599 = vmatpush1.msra.mxu0 %v417
    %600 = vmatprep.subr.mxu0 %v425
    %601 = vmatpush1.msra.mxu0 %v424
    %602 = vmatprep.subr.mxu0 %v432
    %603 = vmatpush1.msra.mxu0 %v431
    %604 = vmatprep.subr.mxu0 %v439
    %605 = vmatpush1.msra.mxu0 %v438
    %606 = vmatprep.subr.mxu0 %v446
    %607 = vmatpush1.msra.mxu0 %v445
    %608 = vmatprep.subr.mxu0 %v453
    %609 = vmatpush1.msra.mxu0 %v452
    %610 = vmatprep.subr.mxu0 %v460
    %611 = vmatpush1.msra.mxu0 %v459
    %612 = vmatprep.subr.mxu0 %v467
    %613 = vmatpush1.msra.mxu0 %v466
    %614 = vmatprep.subr.mxu0 %v474
    %615 = vmatpush1.msra.mxu0 %v473
    %616 = vmatprep.subr.mxu0 %v481
    %617 = vmatpush1.msra.mxu0 %v480
    %618 = vmatprep.subr.mxu0 %v488
    %619 = vmatpush1.msra.mxu0 %v487
    %620 = vmatprep.subr.mxu0 %v495
    %621 = vmatpush1.msra.mxu0 %v494
    %622 = vmatprep.subr.mxu0 %v502
    %623 = vmatpush1.msra.mxu0 %v501
    %624 = vmatprep.subr.mxu0 %v509
    %625 = vmatpush1.msra.mxu0 %v508
    %626 = vmatprep.subr.mxu0 %v516
    %627 = vmatpush1.msra.mxu0 %v515
    %628 = vmatprep.subr.mxu0 %v523
    %629 = vmatpush1.msra.mxu0 %v522
    %630 = vmatprep.mubr.f32.mxu0 %v304
    %631 = vmatmul.mubr.f32.gmra.mrb[0].mxu0 %v303
    %v632 = vpop.f32.mrb[0].mxu0
    %v633 = vadd.f32 %v534, %v632
    %v634 = vpop.f32.mrb[0].mxu0
    %v635 = vadd.f32 %v538, %v634
    %636 = vdwg.mxu0
    %637 = vmatprep.subr.mxu0 %v308
    %638 = vmatpush1.msra.mxu0 %v307
    %639 = vmatprep.subr.mxu0 %v315
    %640 = vmatpush1.msra.mxu0 %v314
    %641 = vmatprep.subr.mxu0 %v322
    %642 = vmatpush1.msra.mxu0 %v321
    %643 = vmatprep.subr.mxu0 %v329
    %644 = vmatpush1.msra.mxu0 %v328
    %645 = vmatprep.subr.mxu0 %v336
    %646 = vmatpush1.msra.mxu0 %v335
    %647 = vmatprep.subr.mxu0 %v343
    %648 = vmatpush1.msra.mxu0 %v342
    %649 = vmatprep.subr.mxu0 %v350
    %650 = vmatpush1.msra.mxu0 %v349
    %651 = vmatprep.subr.mxu0 %v357
    %652 = vmatpush1.msra.mxu0 %v356
    %653 = vmatprep.subr.mxu0 %v364
    %654 = vmatpush1.msra.mxu0 %v363
    %655 = vmatprep.subr.mxu0 %v371
    %656 = vmatpush1.msra.mxu0 %v370
    %657 = vmatprep.subr.mxu0 %v378
    %658 = vmatpush1.msra.mxu0 %v377
    %659 = vmatprep.subr.mxu0 %v385
    %660 = vmatpush1.msra.mxu0 %v384
    %661 = vmatprep.subr.mxu0 %v392
    %662 = vmatpush1.msra.mxu0 %v391
    %663 = vmatprep.subr.mxu0 %v399
    %664 = vmatpush1.msra.mxu0 %v398
    %665 = vmatprep.subr.mxu0 %v406
    %666 = vmatpush1.msra.mxu0 %v405
    %667 = vmatprep.subr.mxu0 %v413
    %668 = vmatpush1.msra.mxu0 %v412
    %669 = vmatprep.subr.mxu0 %v420
    %670 = vmatpush1.msra.mxu0 %v419
    %671 = vmatprep.subr.mxu0 %v427
    %672 = vmatpush1.msra.mxu0 %v426
    %673 = vmatprep.subr.mxu0 %v434
    %674 = vmatpush1.msra.mxu0 %v433
    %675 = vmatprep.subr.mxu0 %v441
    %676 = vmatpush1.msra.mxu0 %v440
    %677 = vmatprep.subr.mxu0 %v448
    %678 = vmatpush1.msra.mxu0 %v447
    %679 = vmatprep.subr.mxu0 %v455
    %680 = vmatpush1.msra.mxu0 %v454
    %681 = vmatprep.subr.mxu0 %v462
    %682 = vmatpush1.msra.mxu0 %v461
    %683 = vmatprep.subr.mxu0 %v469
    %684 = vmatpush1.msra.mxu0 %v468
    %685 = vmatprep.subr.mxu0 %v476
    %686 = vmatpush1.msra.mxu0 %v475
    %687 = vmatprep.subr.mxu0 %v483
    %688 = vmatpush1.msra.mxu0 %v482
    %689 = vmatprep.subr.mxu0 %v490
    %690 = vmatpush1.msra.mxu0 %v489
    %691 = vmatprep.subr.mxu0 %v497
    %692 = vmatpush1.msra.mxu0 %v496
    %693 = vmatprep.subr.mxu0 %v504
    %694 = vmatpush1.msra.mxu0 %v503
    %695 = vmatprep.subr.mxu0 %v511
    %696 = vmatpush1.msra.mxu0 %v510
    %697 = vmatprep.subr.mxu0 %v518
    %698 = vmatpush1.msra.mxu0 %v517
    %699 = vmatprep.subr.mxu0 %v525
    %700 = vmatpush1.msra.mxu0 %v524
    %701 = vmatprep.mubr.f32.mxu0 %v304
    %702 = vmatmul.mubr.f32.gmra.mrb[0].mxu0 %v303
    %v703 = vpop.f32.mrb[0].mxu0
    %v704 = vadd.f32 %v542, %v703
    %v705 = vpop.f32.mrb[0].mxu0
    %v706 = vadd.f32 %v546, %v705
    %707 = vdwg.mxu0
    %708 = vmatprep.subr.mxu0 %v310
    %709 = vmatpush1.msra.mxu0 %v309
    %710 = vmatprep.subr.mxu0 %v317
    %711 = vmatpush1.msra.mxu0 %v316
    %712 = vmatprep.subr.mxu0 %v324
    %713 = vmatpush1.msra.mxu0 %v323
    %714 = vmatprep.subr.mxu0 %v331
    %715 = vmatpush1.msra.mxu0 %v330
    %716 = vmatprep.subr.mxu0 %v338
    %717 = vmatpush1.msra.mxu0 %v337
    %718 = vmatprep.subr.mxu0 %v345
    %719 = vmatpush1.msra.mxu0 %v344
    %720 = vmatprep.subr.mxu0 %v352
    %721 = vmatpush1.msra.mxu0 %v351
    %722 = vmatprep.subr.mxu0 %v359
    %723 = vmatpush1.msra.mxu0 %v358
    %724 = vmatprep.subr.mxu0 %v366
    %725 = vmatpush1.msra.mxu0 %v365
    %726 = vmatprep.subr.mxu0 %v373
    %727 = vmatpush1.msra.mxu0 %v372
    %728 = vmatprep.subr.mxu0 %v380
    %729 = vmatpush1.msra.mxu0 %v379
    %730 = vmatprep.subr.mxu0 %v387
    %731 = vmatpush1.msra.mxu0 %v386
    %732 = vmatprep.subr.mxu0 %v394
    %733 = vmatpush1.msra.mxu0 %v393
    %734 = vmatprep.subr.mxu0 %v401
    %735 = vmatpush1.msra.mxu0 %v400
    %736 = vmatprep.subr.mxu0 %v408
    %737 = vmatpush1.msra.mxu0 %v407
    %738 = vmatprep.subr.mxu0 %v415
    %739 = vmatpush1.msra.mxu0 %v414
    %740 = vmatprep.subr.mxu0 %v422
    %741 = vmatpush1.msra.mxu0 %v421
    %742 = vmatprep.subr.mxu0 %v429
    %743 = vmatpush1.msra.mxu0 %v428
    %744 = vmatprep.subr.mxu0 %v436
    %745 = vmatpush1.msra.mxu0 %v435
    %746 = vmatprep.subr.mxu0 %v443
    %747 = vmatpush1.msra.mxu0 %v442
    %748 = vmatprep.subr.mxu0 %v450
    %749 = vmatpush1.msra.mxu0 %v449
    %750 = vmatprep.subr.mxu0 %v457
    %751 = vmatpush1.msra.mxu0 %v456
    %752 = vmatprep.subr.mxu0 %v464
    %753 = vmatpush1.msra.mxu0 %v463
    %754 = vmatprep.subr.mxu0 %v471
    %755 = vmatpush1.msra.mxu0 %v470
    %756 = vmatprep.subr.mxu0 %v478
    %757 = vmatpush1.msra.mxu0 %v477
    %758 = vmatprep.subr.mxu0 %v485
    %759 = vmatpush1.msra.mxu0 %v484
    %760 = vmatprep.subr.mxu0 %v492
    %761 = vmatpush1.msra.mxu0 %v491
    %762 = vmatprep.subr.mxu0 %v499
    %763 = vmatpush1.msra.mxu0 %v498
    %764 = vmatprep.subr.mxu0 %v506
    %765 = vmatpush1.msra.mxu0 %v505
    %766 = vmatprep.subr.mxu0 %v513
    %767 = vmatpush1.msra.mxu0 %v512
    %768 = vmatprep.subr.mxu0 %v520
    %769 = vmatpush1.msra.mxu0 %v519
    %770 = vmatprep.subr.mxu0 %v527
    %771 = vmatpush1.msra.mxu0 %v526
    %772 = vmatprep.mubr.f32.mxu0 %v304
    %773 = vmatmul.mubr.f32.gmra.mrb[0].mxu0 %v303
    %v774 = vpop.f32.mrb[0].mxu0
    %v775 = vadd.f32 %v550, %v774
    %v776 = vpop.f32.mrb[0].mxu0
    %v777 = vadd.f32 %v554, %v776
    %778 = vdwg.mxu0
    %779 = vmatprep.subr.mxu0 0.0
    %780 = vmatpush1.msra.mxu0 %v311
    %781 = vmatprep.subr.mxu0 0.0
    %782 = vmatpush1.msra.mxu0 %v318
    %783 = vmatprep.subr.mxu0 0.0
    %784 = vmatpush1.msra.mxu0 %v325
    %785 = vmatprep.subr.mxu0 0.0
    %786 = vmatpush1.msra.mxu0 %v332
    %787 = vmatprep.subr.mxu0 0.0
    %788 = vmatpush1.msra.mxu0 %v339
    %789 = vmatprep.subr.mxu0 0.0
    %790 = vmatpush1.msra.mxu0 %v346
    %791 = vmatprep.subr.mxu0 0.0
    %792 = vmatpush1.msra.mxu0 %v353
    %793 = vmatprep.subr.mxu0 0.0
    %794 = vmatpush1.msra.mxu0 %v360
    %795 = vmatprep.subr.mxu0 0.0
    %796 = vmatpush1.msra.mxu0 %v367
    %797 = vmatprep.subr.mxu0 0.0
    %798 = vmatpush1.msra.mxu0 %v374
    %799 = vmatprep.subr.mxu0 0.0
    %800 = vmatpush1.msra.mxu0 %v381
    %801 = vmatprep.subr.mxu0 0.0
    %802 = vmatpush1.msra.mxu0 %v388
    %803 = vmatprep.subr.mxu0 0.0
    %804 = vmatpush1.msra.mxu0 %v395
    %805 = vmatprep.subr.mxu0 0.0
    %806 = vmatpush1.msra.mxu0 %v402
    %807 = vmatprep.subr.mxu0 0.0
    %808 = vmatpush1.msra.mxu0 %v409
    %809 = vmatprep.subr.mxu0 0.0
    %810 = vmatpush1.msra.mxu0 %v416
    %811 = vmatprep.subr.mxu0 0.0
    %812 = vmatpush1.msra.mxu0 %v423
    %813 = vmatprep.subr.mxu0 0.0
    %814 = vmatpush1.msra.mxu0 %v430
    %815 = vmatprep.subr.mxu0 0.0
    %816 = vmatpush1.msra.mxu0 %v437
    %817 = vmatprep.subr.mxu0 0.0
    %818 = vmatpush1.msra.mxu0 %v444
    %819 = vmatprep.subr.mxu0 0.0
    %820 = vmatpush1.msra.mxu0 %v451
    %821 = vmatprep.subr.mxu0 0.0
    %822 = vmatpush1.msra.mxu0 %v458
    %823 = vmatprep.subr.mxu0 0.0
    %824 = vmatpush1.msra.mxu0 %v465
    %825 = vmatprep.subr.mxu0 0.0
    %826 = vmatpush1.msra.mxu0 %v472
    %827 = vmatprep.subr.mxu0 0.0
    %828 = vmatpush1.msra.mxu0 %v479
    %829 = vmatprep.subr.mxu0 0.0
    %830 = vmatpush1.msra.mxu0 %v486
    %831 = vmatprep.subr.mxu0 0.0
    %832 = vmatpush1.msra.mxu0 %v493
    %833 = vmatprep.subr.mxu0 0.0
    %834 = vmatpush1.msra.mxu0 %v500
    %835 = vmatprep.subr.mxu0 0.0
    %836 = vmatpush1.msra.mxu0 %v507
    %837 = vmatprep.subr.mxu0 0.0
    %838 = vmatpush1.msra.mxu0 %v514
    %839 = vmatprep.subr.mxu0 0.0
    %840 = vmatpush1.msra.mxu0 %v521
    %841 = vmatprep.subr.mxu0 0.0
    %842 = vmatpush1.msra.mxu0 %v528
    %843 = vmatprep.mubr.f32.mxu0 %v304
    %844 = vmatmul.mubr.f32.gmra.mrb[0].mxu0 %v303
    %v845 = vpop.f32.mrb[0].mxu0
    %v846 = vadd.f32 %v558, %v845
    %v847 = vpop.f32.mrb[0].mxu0
    %848 = vdwg.mxu0
    %849 = vst [vmem:[#allocation10] sm:$0xff] %v633
    %850 = vst [vmem:[#allocation10 + $0x8] sm:$0xff] %v635
    %851 = vst [vmem:[#allocation10 + $0x10] sm:$0xff] %v704
    %852 = vst [vmem:[#allocation10 + $0x18] sm:$0xff] %v706
    %853 = vst [vmem:[#allocation10 + $0x20] sm:$0xff] %v775
    %854 = vst [vmem:[#allocation10 + $0x28] sm:$0xff] %v777
    %855 = vst [vmem:[#allocation10 + $0x30] sm:$0xff] %v846
    // Predicated region
    $region54: #{tpu_custom_call.1} parent=1 // pred_check
      _
    $region55: #{tpu_custom_call.1} parent=1 // pred_check_branch
      %857 = sbr.rel (0) target = $region57
    $region56: #{tpu_custom_call.1} parent=1 // pred_region
      %s859 = ssub.s32 896, 896
      %860 = vsyncadd [#allocation4], %s859
      %s862 = sshll.u32 [#allocation10], 4
      %s863 = int_to_ptr.vmem [resolvable:$true] %s862
      %865 = dma.vmem_to_hbm [thread:$0]  %s863, 896, %s9, [#allocation4]
    $region57: #{tpu_custom_call.1} parent=1 // pred_fallthru
      _
    // Predicated region
    $region58: #{tpu_custom_call.1} parent=1 // pred_check
      _
    $region59: #{tpu_custom_call.1} parent=1 // pred_check_branch
      %867 = sbr.rel (0) target = $region61
    $region60: #{tpu_custom_call.1} parent=1 // pred_region
      %868 = dma.done [#allocation4], 896
    $region61: #{tpu_custom_call.1} parent=1 // pred_fallthru
      _
    %869 = vsyncpa [#allocation3], 1
    %870 = vsyncpa [#allocation6], 1
    %871 = vsyncpa [#allocation9], 1
    %872 = vsyncpa [#allocation4], 1

</llo_original>
